<compile_context>
chip_gen: v7x
topology: tpu7x:2x2x1
jax: 0.10.0
libtpu: 0.0.40
codegen_flags: <defaults>
</compile_context>

<pallas_src>
import math

import jax
import jax.numpy as jnp
from jax.experimental import pallas as pl
from jax.experimental.pallas import tpu as pltpu


# ----------------------------- configuration (small, synthetic) --------------
BATCH = 2
SEQ = 8
HIDDEN = 32          # config.hidden_size
INTERMEDIATE = 64    # config.intermediate_size
GELU_C = math.sqrt(2.0 / math.pi)  # gelu_pytorch_tanh constant


# ----------------------------- Pallas kernel ---------------------------------
def _siglip_mlp_kernel(x_ref, w1_ref, b1_ref, w2_ref, b2_ref, out_ref):
    # x tile: (TM, H) f32 activations; weights are bf16-resident; biases f32.
    x = x_ref[...].astype(jnp.bfloat16)

    # fc1: bf16 MXU matmul, f32 accumulation, f32 bias add.
    h = jnp.dot(x, w1_ref[...], preferred_element_type=jnp.float32) + b1_ref[...]

    # gelu_pytorch_tanh, kept entirely in f32 (tanh -> EUP slot; VALU muls are
    # filler under the MXU once tiles are real, so no further micro-opt here).
    act = 0.5 * h * (1.0 + jnp.tanh(GELU_C * (h + 0.044715 * h * h * h)))

    # fc2: cast to bf16 only at the dot; accumulate + bias add in f32.
    y = jnp.dot(act.astype(jnp.bfloat16), w2_ref[...],
                preferred_element_type=jnp.float32) + b2_ref[...]

    # Dense store of the whole (TM, H) tile.
    out_ref[...] = y.astype(out_ref.dtype)


def siglip_mlp(hidden_states, w1, b1, w2, b2, *, tm=None):
    """SigLipMLP forward. hidden_states: (B, S, H) -> (B, S, H).

    Weights are (in_features, out_features); y = x @ W + b matches PyTorch
    nn.Linear (x @ W.T + b with W stored as (out, in)).
    """
    B, S, H = hidden_states.shape
    I = w1.shape[1]
    M = B * S

    # Wrapper-side layout plumbing only: fuse batch*seq into one row axis.
    x2d = hidden_states.reshape(M, H)

    # M tile: 256 rows at real sizes; at toy sizes just round M up to 8.
    if tm is None:
        tm = 256 if M >= 256 else max(8, ((M + 7) // 8) * 8)
    Mp = ((M + tm - 1) // tm) * tm
    if Mp != M:
        x2d = jnp.pad(x2d, ((0, Mp - M), (0, 0)))

    # bf16 weights for the MXU (halves weight VMEM + HBM traffic); f32 biases.
    w1b = w1.astype(jnp.bfloat16)
    w2b = w2.astype(jnp.bfloat16)
    b1f = b1.astype(jnp.float32)
    b2f = b2.astype(jnp.float32)

    grid = (Mp // tm,)
    cost = pl.CostEstimate(
        flops=4 * Mp * H * I,                       # two matmuls: 2*M*H*I each
        transcendentals=Mp * I,                     # one tanh per intermediate
        bytes_accessed=(x2d.size * 4 + w1b.size * 2 + w2b.size * 2
                        + b1f.size * 4 + b2f.size * 4 + Mp * H * 4),
    )

    out2d = pl.pallas_call(
        _siglip_mlp_kernel,
        out_shape=jax.ShapeDtypeStruct((Mp, H), hidden_states.dtype),
        grid_spec=pltpu.PrefetchScalarGridSpec(
            num_scalar_prefetch=0,
            grid=grid,
            in_specs=[
                pl.BlockSpec((tm, H), lambda i: (i, 0)),   # x tile (pipelined)
                pl.BlockSpec((H, I), lambda i: (0, 0)),    # w1 resident
                pl.BlockSpec((1, I), lambda i: (0, 0)),    # b1 resident
                pl.BlockSpec((I, H), lambda i: (0, 0)),    # w2 resident
                pl.BlockSpec((1, H), lambda i: (0, 0)),    # b2 resident
            ],
            out_specs=pl.BlockSpec((tm, H), lambda i: (i, 0)),
        ),
        compiler_params=pltpu.CompilerParams(
            dimension_semantics=("parallel",),             # megacore on v7x
            vmem_limit_bytes=64 * 1024 * 1024,
        ),
        cost_estimate=cost,
    )(x2d, w1b, b1f, w2b, b2f)

    return out2d[:M].reshape(B, S, H)


# ----------------------------- pure-JAX references ----------------------------
def reference_f32(hidden_states, w1, b1, w2, b2):
    h = hidden_states @ w1 + b1
    act = 0.5 * h * (1.0 + jnp.tanh(GELU_C * (h + 0.044715 * h ** 3)))
    return act @ w2 + b2


def reference_bf16_matmul(hidden_states, w1, b1, w2, b2):
    """Same numerics as the kernel (bf16 matmul operands, f32 accumulation)."""
    h = jnp.dot(hidden_states.astype(jnp.bfloat16), w1.astype(jnp.bfloat16),
                preferred_element_type=jnp.float32) + b1
    act = 0.5 * h * (1.0 + jnp.tanh(GELU_C * (h + 0.044715 * h ** 3)))
    return jnp.dot(act.astype(jnp.bfloat16), w2.astype(jnp.bfloat16),
                   preferred_element_type=jnp.float32) + b2


# ----------------------------- main -------------------------------------------
if __name__ == "__main__":
    key = jax.random.PRNGKey(0)
    k_x, k_w1, k_b1, k_w2, k_b2 = jax.random.split(key, 5)
    f = jnp.float32
    s = 0.05

    hidden_states = jax.random.normal(k_x, (BATCH, SEQ, HIDDEN), f)
    w1 = jax.random.normal(k_w1, (HIDDEN, INTERMEDIATE), f) * s   # fc1 weight (in, out)
    b1 = jax.random.normal(k_b1, (1, INTERMEDIATE), f) * s        # fc1 bias
    w2 = jax.random.normal(k_w2, (INTERMEDIATE, HIDDEN), f) * s   # fc2 weight (in, out)
    b2 = jax.random.normal(k_b2, (1, HIDDEN), f) * s              # fc2 bias

    out = siglip_mlp(hidden_states, w1, b1, w2, b2)
    out = jax.block_until_ready(out)
    assert out.shape == (BATCH, SEQ, HIDDEN)

    # Kernel-logic check: must match a pure-JAX impl with identical bf16 casts.
    ref_bf16 = reference_bf16_matmul(hidden_states.reshape(-1, HIDDEN), w1, b1, w2, b2)
    ref_bf16 = ref_bf16.reshape(BATCH, SEQ, HIDDEN)
    err_bf16 = jnp.max(jnp.abs(out - ref_bf16))
    assert jnp.allclose(out, ref_bf16, atol=2e-3, rtol=2e-3), (
        f"bf16-matched max abs err {err_bf16}")

    # Sanity check vs. full-f32 PyTorch semantics (loose tol for bf16 operands).
    ref_f32 = reference_f32(hidden_states, w1, b1, w2, b2)
    err_f32 = jnp.max(jnp.abs(out - ref_f32))
    assert jnp.allclose(out, ref_f32, atol=2e-2, rtol=2e-2), (
        f"f32-reference max abs err {err_f32}")

    print("KERNEL_OK")
</pallas_src>

<mosaic_0001>
module attributes {stable_mosaic.version = 11 : i64} {
  func.func @_siglip_mlp_kernel(%arg0: i32, %arg1: memref<16x32xf32, #tpu.memory_space<vmem>>, %arg2: memref<32x64xbf16, #tpu.memory_space<vmem>>, %arg3: memref<1x64xf32, #tpu.memory_space<vmem>>, %arg4: memref<64x32xbf16, #tpu.memory_space<vmem>>, %arg5: memref<1x32xf32, #tpu.memory_space<vmem>>, %arg6: memref<16x32xf32, #tpu.memory_space<vmem>>) attributes {dimension_semantics = [#tpu.dimension_semantics<parallel>], iteration_bounds = array<i64: 1>, scalar_prefetch = 0 : i64, scratch_operands = 0 : i64, tpu.core_type = #tpu.core_type<tc>, window_params = [{transform_indices = @transform_0, window_bounds = array<i64: 16, 32>}, {pipeline_mode = #tpu.pipeline_mode<synchronous>, transform_indices = @transform_1, window_bounds = array<i64: 32, 64>}, {pipeline_mode = #tpu.pipeline_mode<synchronous>, transform_indices = @transform_2, window_bounds = array<i64: 1, 64>}, {pipeline_mode = #tpu.pipeline_mode<synchronous>, transform_indices = @transform_3, window_bounds = array<i64: 64, 32>}, {pipeline_mode = #tpu.pipeline_mode<synchronous>, transform_indices = @transform_4, window_bounds = array<i64: 1, 32>}, {transform_indices = @transform_5, window_bounds = array<i64: 16, 32>}]} {
    %c0 = arith.constant 0 : index
    %c0_0 = arith.constant 0 : index
    %0 = vector.load %arg1[%c0, %c0_0] : memref<16x32xf32, #tpu.memory_space<vmem>>, vector<16x32xf32>
    %1 = arith.truncf %0 : vector<16x32xf32> to vector<16x32xbf16>
    %c0_1 = arith.constant 0 : index
    %c0_2 = arith.constant 0 : index
    %2 = vector.load %arg2[%c0_1, %c0_2] : memref<32x64xbf16, #tpu.memory_space<vmem>>, vector<32x64xbf16>
    %cst = arith.constant dense<0.000000e+00> : vector<16x64xf32>
    %3 = tpu.matmul %1, %2, %cst {dimension_numbers = #tpu.dot_dimension_numbers<[1], [0], [0], [1], [0, 0, 1, 1], [], []>} : vector<16x32xbf16>, vector<32x64xbf16>, vector<16x64xf32> -> vector<16x64xf32>
    %c0_3 = arith.constant 0 : index
    %c0_4 = arith.constant 0 : index
    %4 = vector.load %arg3[%c0_3, %c0_4] : memref<1x64xf32, #tpu.memory_space<vmem>>, vector<1x64xf32>
    %5 = vector.broadcast %4 : vector<1x64xf32> to vector<16x64xf32>
    %6 = arith.addf %3, %5 : vector<16x64xf32>
    %cst_5 = arith.constant 5.000000e-01 : f32
    %7 = vector.broadcast %cst_5 : f32 to vector<16x64xf32>
    %8 = arith.mulf %7, %6 : vector<16x64xf32>
    %cst_6 = arith.constant 4.471500e-02 : f32
    %9 = vector.broadcast %cst_6 : f32 to vector<16x64xf32>
    %10 = arith.mulf %9, %6 : vector<16x64xf32>
    %11 = arith.mulf %10, %6 : vector<16x64xf32>
    %12 = arith.mulf %11, %6 : vector<16x64xf32>
    %13 = arith.addf %6, %12 : vector<16x64xf32>
    %cst_7 = arith.constant 0.797884583 : f32
    %14 = vector.broadcast %cst_7 : f32 to vector<16x64xf32>
    %15 = arith.mulf %14, %13 : vector<16x64xf32>
    %16 = math.tanh %15 : vector<16x64xf32>
    %cst_8 = arith.constant 1.000000e+00 : f32
    %17 = vector.broadcast %cst_8 : f32 to vector<16x64xf32>
    %18 = arith.addf %17, %16 : vector<16x64xf32>
    %19 = arith.mulf %8, %18 : vector<16x64xf32>
    %20 = arith.truncf %19 : vector<16x64xf32> to vector<16x64xbf16>
    %c0_9 = arith.constant 0 : index
    %c0_10 = arith.constant 0 : index
    %21 = vector.load %arg4[%c0_9, %c0_10] : memref<64x32xbf16, #tpu.memory_space<vmem>>, vector<64x32xbf16>
    %cst_11 = arith.constant dense<0.000000e+00> : vector<16x32xf32>
    %22 = tpu.matmul %20, %21, %cst_11 {dimension_numbers = #tpu.dot_dimension_numbers<[1], [0], [0], [1], [0, 0, 1, 1], [], []>} : vector<16x64xbf16>, vector<64x32xbf16>, vector<16x32xf32> -> vector<16x32xf32>
    %c0_12 = arith.constant 0 : index
    %c0_13 = arith.constant 0 : index
    %23 = vector.load %arg5[%c0_12, %c0_13] : memref<1x32xf32, #tpu.memory_space<vmem>>, vector<1x32xf32>
    %24 = vector.broadcast %23 : vector<1x32xf32> to vector<16x32xf32>
    %25 = arith.addf %22, %24 : vector<16x32xf32>
    %c0_14 = arith.constant 0 : index
    %c0_15 = arith.constant 0 : index
    %26 = vector.load %arg6[%c0_14, %c0_15] : memref<16x32xf32, #tpu.memory_space<vmem>>, vector<16x32xf32>
    tpu.vector_store %arg6[%c0_14, %c0_15], %25 {strides = array<i32>} : memref<16x32xf32, #tpu.memory_space<vmem>>, vector<16x32xf32>,
    return
  }
  func.func @transform_0(%arg0: i32) -> (i32, i32) {
    %c0_i32 = arith.constant 0 : i32
    %c0_i32_0 = arith.constant 0 : i32
    return %arg0, %c0_i32 : i32, i32
  }
  func.func @transform_1(%arg0: i32) -> (i32, i32) {
    %c0_i32 = arith.constant 0 : i32
    %c0_i32_0 = arith.constant 0 : i32
    %c0_i32_1 = arith.constant 0 : i32
    return %c0_i32, %c0_i32_0 : i32, i32
  }
  func.func @transform_2(%arg0: i32) -> (i32, i32) {
    %c0_i32 = arith.constant 0 : i32
    %c0_i32_0 = arith.constant 0 : i32
    %c0_i32_1 = arith.constant 0 : i32
    return %c0_i32, %c0_i32_0 : i32, i32
  }
  func.func @transform_3(%arg0: i32) -> (i32, i32) {
    %c0_i32 = arith.constant 0 : i32
    %c0_i32_0 = arith.constant 0 : i32
    %c0_i32_1 = arith.constant 0 : i32
    return %c0_i32, %c0_i32_0 : i32, i32
  }
  func.func @transform_4(%arg0: i32) -> (i32, i32) {
    %c0_i32 = arith.constant 0 : i32
    %c0_i32_0 = arith.constant 0 : i32
    %c0_i32_1 = arith.constant 0 : i32
    return %c0_i32, %c0_i32_0 : i32, i32
  }
  func.func @transform_5(%arg0: i32) -> (i32, i32) {
    %c0_i32 = arith.constant 0 : i32
    %c0_i32_0 = arith.constant 0 : i32
    return %arg0, %c0_i32 : i32, i32
  }
}

</mosaic_0001>

<llo_original>
// kernel: tpu_custom_call.1
$region0: #{tpu_custom_call.1}
  #allocation0 [shape = 'u32[]', space=smem, size = 0x4, offset = 0x4, fixed_abs, tag = 'smem constant byte address 0x4 - core index']
  #allocation1 [shape = 'u32[144,128]{1,0:T(1,128)}', space=vmem, size = 0x12000, scoped, tag = 'internal scratch']
  %s0 = inlined_call_operand.hbm [shape: f32[16,32], index: 0, kind: input, shape index: {}]
  %s1 = inlined_call_operand.hbm [shape: bf16[32,64], index: 1, kind: input, shape index: {}]
  %s2 = inlined_call_operand.hbm [shape: f32[1,64], index: 2, kind: input, shape index: {}]
  %s3 = inlined_call_operand.hbm [shape: bf16[64,32], index: 3, kind: input, shape index: {}]
  %s4 = inlined_call_operand.hbm [shape: f32[1,32], index: 4, kind: input, shape index: {}]
  %s5 = inlined_call_operand.hbm [shape: f32[16,32], index: 5, kind: output, shape index: {}]
  %s6 = sld [smem:[#allocation0]]
  $region50: #{tpu_custom_call.1} parent=0
    _
  %s8 = ssub.s32 1, %s6
  %s9 = scalar_select 0, %s8, %s6
  $region1: #{tpu_custom_call.1} parent=0
    #allocation2 [shape = 'u8[8192]{0}', space=vmem, size = 0x2000, scoped, tag = 'input window, operand 0, single buffered']
    #allocation3 [shape = 's32[1]{0}', space=sflag, size = 0x4, scoped, tag = 'scoped memory for tpu_custom_call.1']
    #allocation4 [shape = 's32[1]{0}', space=sflag, size = 0x4, scoped, tag = 'scoped memory for tpu_custom_call.1']
    #allocation5 [shape = 'u8[8192]{0}', space=vmem, size = 0x2000, scoped, tag = 'input window, operand 1, single buffered']
    #allocation6 [shape = 's32[1]{0}', space=sflag, size = 0x4, scoped, tag = 'scoped memory for tpu_custom_call.1']
    #allocation7 [shape = 'u8[512]{0}', space=vmem, size = 0x400, scoped, tag = 'input window, operand 2, single buffered']
    #allocation8 [shape = 'u8[16384]{0}', space=vmem, size = 0x4000, scoped, tag = 'input window, operand 3, single buffered']
    #allocation9 [shape = 's32[1]{0}', space=sflag, size = 0x4, scoped, tag = 'scoped memory for tpu_custom_call.1']
    #allocation10 [shape = 'u8[512]{0}', space=vmem, size = 0x400, scoped, tag = 'input window, operand 4, single buffered']
    #allocation11 [shape = 'u8[8192]{0}', space=vmem, size = 0x2000, scoped, tag = 'output window, operand 0, single buffered']
    %10 = vsyncpa [#allocation3], 0
    %11 = vsyncpa [#allocation6], 0
    %12 = vsyncpa [#allocation9], 0
    %13 = vsyncpa [#allocation4], 0
    // Predicated region
    $region2: #{tpu_custom_call.1} parent=1 // pred_check
      _
    $region3: #{tpu_custom_call.1} parent=1 // pred_check_branch
      %15 = sbr.rel (0) target = $region5
    $region4: #{tpu_custom_call.1} parent=1 // pred_region
      %s17 = ssub.s32 256, 256
      %18 = vsyncadd [#allocation3], %s17
      %s19 = sshll.u32 [#allocation2], 4
      %s20 = int_to_ptr.vmem [resolvable:$true] %s19
      %25 = dma.hbm_to_vmem [thread:$0]  %s0, 256, %s20, [#allocation3], 128, 128, 8
    $region5: #{tpu_custom_call.1} parent=1 // pred_fallthru
      _
    // Predicated region
    $region6: #{tpu_custom_call.1} parent=1 // pred_check
      _
    $region7: #{tpu_custom_call.1} parent=1 // pred_check_branch
      %27 = sbr.rel (0) target = $region9
    $region8: #{tpu_custom_call.1} parent=1 // pred_region
      %s29 = ssub.s32 256, 256
      %30 = vsyncadd [#allocation6], %s29
      %s31 = sshll.u32 [#allocation5], 4
      %s32 = int_to_ptr.vmem [resolvable:$true] %s31
      %37 = dma.hbm_to_vmem [thread:$0]  %s1, 256, %s32, [#allocation6], 64, 64, 4
    $region9: #{tpu_custom_call.1} parent=1 // pred_fallthru
      _
    // Predicated region
    $region10: #{tpu_custom_call.1} parent=1 // pred_check
      _
    $region11: #{tpu_custom_call.1} parent=1 // pred_check_branch
      %39 = sbr.rel (0) target = $region13
    $region12: #{tpu_custom_call.1} parent=1 // pred_region
      %s41 = ssub.s32 16, 16
      %42 = vsyncadd [#allocation6], %s41
      %s44 = sshll.u32 [#allocation7], 4
      %s45 = int_to_ptr.vmem [resolvable:$true] %s44
      %47 = dma.hbm_to_vmem [thread:$0]  %s2, 16, %s45, [#allocation6]
    $region13: #{tpu_custom_call.1} parent=1 // pred_fallthru
      _
    // Predicated region
    $region14: #{tpu_custom_call.1} parent=1 // pred_check
      _
    $region15: #{tpu_custom_call.1} parent=1 // pred_check_branch
      %49 = sbr.rel (0) target = $region17
    $region16: #{tpu_custom_call.1} parent=1 // pred_region
      %s51 = ssub.s32 512, 512
      %52 = vsyncadd [#allocation9], %s51
      %s53 = sshll.u32 [#allocation8], 4
      %s54 = int_to_ptr.vmem [resolvable:$true] %s53
      %59 = dma.hbm_to_vmem [thread:$0]  %s3, 512, %s54, [#allocation9], 64, 64, 4
    $region17: #{tpu_custom_call.1} parent=1 // pred_fallthru
      _
    // Predicated region
    $region18: #{tpu_custom_call.1} parent=1 // pred_check
      _
    $region19: #{tpu_custom_call.1} parent=1 // pred_check_branch
      %61 = sbr.rel (0) target = $region21
    $region20: #{tpu_custom_call.1} parent=1 // pred_region
      %s63 = ssub.s32 16, 16
      %64 = vsyncadd [#allocation9], %s63
      %s66 = sshll.u32 [#allocation10], 4
      %s67 = int_to_ptr.vmem [resolvable:$true] %s66
      %69 = dma.hbm_to_vmem [thread:$0]  %s4, 16, %s67, [#allocation9]
    $region21: #{tpu_custom_call.1} parent=1 // pred_fallthru
      _
    // Predicated region
    $region22: #{tpu_custom_call.1} parent=1 // pred_check
      _
    $region23: #{tpu_custom_call.1} parent=1 // pred_check_branch
      %71 = sbr.rel (0) target = $region25
    $region24: #{tpu_custom_call.1} parent=1 // pred_region
      %72 = dma.done [#allocation3], 256
    $region25: #{tpu_custom_call.1} parent=1 // pred_fallthru
      _
    // Predicated region
    $region26: #{tpu_custom_call.1} parent=1 // pred_check
      _
    $region27: #{tpu_custom_call.1} parent=1 // pred_check_branch
      %74 = sbr.rel (0) target = $region29
    $region28: #{tpu_custom_call.1} parent=1 // pred_region
      %75 = dma.done [#allocation6], 256
    $region29: #{tpu_custom_call.1} parent=1 // pred_fallthru
      _
    // Predicated region
    $region30: #{tpu_custom_call.1} parent=1 // pred_check
      _
    $region31: #{tpu_custom_call.1} parent=1 // pred_check_branch
      %77 = sbr.rel (0) target = $region33
    $region32: #{tpu_custom_call.1} parent=1 // pred_region
      %78 = dma.done [#allocation6], 16
    $region33: #{tpu_custom_call.1} parent=1 // pred_fallthru
      _
    // Predicated region
    $region34: #{tpu_custom_call.1} parent=1 // pred_check
      _
    $region35: #{tpu_custom_call.1} parent=1 // pred_check_branch
      %80 = sbr.rel (0) target = $region37
    $region36: #{tpu_custom_call.1} parent=1 // pred_region
      %81 = dma.done [#allocation9], 512
    $region37: #{tpu_custom_call.1} parent=1 // pred_fallthru
      _
    // Predicated region
    $region38: #{tpu_custom_call.1} parent=1 // pred_check
      _
    $region39: #{tpu_custom_call.1} parent=1 // pred_check_branch
      %83 = sbr.rel (0) target = $region41
    $region40: #{tpu_custom_call.1} parent=1 // pred_region
      %84 = dma.done [#allocation9], 16
    $region41: #{tpu_custom_call.1} parent=1 // pred_fallthru
      _
    %v86 = vld [vmem:[#allocation2] sm:$0xff]
    %v87 = vld [vmem:[#allocation2 + $0x8] sm:$0xff]
    %v88 = vpack.c.bf16 %v87, %v86
    %v89 = vld [vmem:[#allocation5] sm:$0xf]
    %v90 = vld [vmem:[#allocation5 + $0x4] sm:$0xf]
    %v91 = vld [vmem:[#allocation5 + $0x8] sm:$0xf]
    %v92 = vld [vmem:[#allocation5 + $0xc] sm:$0xf]
    %v93 = vld [vmem:[#allocation7] sm:$0x1]
    %v95 = vlaneseq
    %v96 = vshrl.u32 %v95, 7
    %v97 = vsub.s32 0, %v96
    %v98 = vrot.slane %v93, %v97
    %v104 = vunpack.c.l.b16 %v89
    %v105 = vunpack.c.l.b16 %v90
    %v106 = vunpack.c.l.b16 %v91
    %v107 = vunpack.c.l.b16 %v92
    %v108 = vpack.c.b16 %v105, %v104
    %v109 = vpack.c.b16 %v107, %v106
    %vm112 = vcmask 261120
    %v114 = vsel %vm112, %v88, 0
    %116 = vmatprep.subr.bf16.mxu0 0
    %117 = vmatpush1.bf16.msra.mxu0 %v108
    %118 = vmatprep.subr.bf16.mxu0 0
    %119 = vmatpush1.bf16.msra.mxu0 %v109
    %120 = vmatprep.subr.bf16.mxu0 0
    %121 = vmatpush1.bf16.msra.mxu0 0
    %122 = vmatprep.subr.bf16.mxu0 0
    %123 = vmatpush1.bf16.msra.mxu0 0
    %124 = vmatprep.subr.bf16.mxu0 0
    %125 = vmatpush1.bf16.msra.mxu0 0
    %126 = vmatprep.subr.bf16.mxu0 0
    %127 = vmatpush1.bf16.msra.mxu0 0
    %128 = vmatprep.subr.bf16.mxu0 0
    %129 = vmatpush1.bf16.msra.mxu0 0
    %130 = vmatprep.subr.bf16.mxu0 0
    %131 = vmatpush1.bf16.msra.mxu0 0
    %132 = vmatprep.subr.bf16.mxu0 0
    %133 = vmatpush1.bf16.msra.mxu0 0
    %134 = vmatprep.subr.bf16.mxu0 0
    %135 = vmatpush1.bf16.msra.mxu0 0
    %136 = vmatprep.subr.bf16.mxu0 0
    %137 = vmatpush1.bf16.msra.mxu0 0
    %138 = vmatprep.subr.bf16.mxu0 0
    %139 = vmatpush1.bf16.msra.mxu0 0
    %140 = vmatprep.subr.bf16.mxu0 0
    %141 = vmatpush1.bf16.msra.mxu0 0
    %142 = vmatprep.subr.bf16.mxu0 0
    %143 = vmatpush1.bf16.msra.mxu0 0
    %144 = vmatprep.subr.bf16.mxu0 0
    %145 = vmatpush1.bf16.msra.mxu0 0
    %146 = vmatprep.subr.bf16.mxu0 0
    %147 = vmatpush1.bf16.msra.mxu0 0
    %148 = vmatprep.mubr.bf16.mxu0 0
    %149 = vmatmul.mubr.bf16.gmra.mrb[0].mxu0 %v114
    %v150 = vpop.f32.mrb[0].mxu0
    %v151 = vadd.f32 %v98, %v150
    %v152 = vpop.f32.mrb[0].mxu0
    %v153 = vpop.f32.mrb[0].mxu0
    %v154 = vadd.f32 %v98, %v153
    %v155 = vpop.f32.mrb[0].mxu0
    %156 = vdwg.mxu0
    %v157 = vmul.f32 %v151, 0.5
    %v158 = vmul.f32 %v154, 0.5
    %v159 = vmul.f32 %v151, 0.044715
    %v160 = vmul.f32 %v154, 0.044715
    %v161 = vmul.f32 %v159, %v151
    %v162 = vmul.f32 %v160, %v154
    %v163 = vmul.f32 %v161, %v151
    %v164 = vmul.f32 %v162, %v154
    %v165 = vadd.f32 %v151, %v163
    %v166 = vadd.f32 %v154, %v164
    %v167 = vmul.f32 %v165, 0.7978846
    %v168 = vmul.f32 %v166, 0.7978846
    %v169 = vtanh.pop %v167
    %v170 = vtanh.pop %v168
    %v171 = vadd.f32 %v169, 1.0
    %v172 = vadd.f32 %v170, 1.0
    %v173 = vmul.f32 %v157, %v171
    %v174 = vmul.f32 %v158, %v172
    %v175 = vpack.c.bf16 %v174, %v173
    %v176 = vld [vmem:[#allocation8] sm:$0xf]
    %v177 = vld [vmem:[#allocation8 + $0x4] sm:$0xf]
    %v178 = vld [vmem:[#allocation8 + $0x8] sm:$0xf]
    %v179 = vld [vmem:[#allocation8 + $0xc] sm:$0xf]
    %v180 = vld [vmem:[#allocation8 + $0x10] sm:$0xf]
    %v181 = vld [vmem:[#allocation8 + $0x14] sm:$0xf]
    %v182 = vld [vmem:[#allocation8 + $0x18] sm:$0xf]
    %v183 = vld [vmem:[#allocation8 + $0x1c] sm:$0xf]
    %v184 = vld [vmem:[#allocation10] sm:$0x1]
    %v186 = vlaneseq
    %v187 = vshrl.u32 %v186, 7
    %v188 = vsub.s32 0, %v187
    %v189 = vrot.slane %v184, %v188
    %v199 = vunpack.c.l.b16 %v176
    %v200 = vunpack.c.l.b16 %v177
    %v201 = vunpack.c.l.b16 %v178
    %v202 = vunpack.c.l.b16 %v179
    %v203 = vunpack.c.l.b16 %v180
    %v204 = vunpack.c.l.b16 %v181
    %v205 = vunpack.c.l.b16 %v182
    %v206 = vunpack.c.l.b16 %v183
    %v207 = vpack.c.b16 %v200, %v199
    %v208 = vpack.c.b16 %v202, %v201
    %v209 = vpack.c.b16 %v204, %v203
    %v210 = vpack.c.b16 %v206, %v205
    %vm215 = vcmask 523264
    %v217 = vsel %vm215, %v175, 0
    %219 = vmatprep.subr.bf16.mxu0 0
    %220 = vmatpush1.bf16.msra.mxu0 %v207
    %221 = vmatprep.subr.bf16.mxu0 0
    %222 = vmatpush1.bf16.msra.mxu0 %v208
    %223 = vmatprep.subr.bf16.mxu0 0
    %224 = vmatpush1.bf16.msra.mxu0 %v209
    %225 = vmatprep.subr.bf16.mxu0 0
    %226 = vmatpush1.bf16.msra.mxu0 %v210
    %227 = vmatprep.subr.bf16.mxu0 0
    %228 = vmatpush1.bf16.msra.mxu0 0
    %229 = vmatprep.subr.bf16.mxu0 0
    %230 = vmatpush1.bf16.msra.mxu0 0
    %231 = vmatprep.subr.bf16.mxu0 0
    %232 = vmatpush1.bf16.msra.mxu0 0
    %233 = vmatprep.subr.bf16.mxu0 0
    %234 = vmatpush1.bf16.msra.mxu0 0
    %235 = vmatprep.subr.bf16.mxu0 0
    %236 = vmatpush1.bf16.msra.mxu0 0
    %237 = vmatprep.subr.bf16.mxu0 0
    %238 = vmatpush1.bf16.msra.mxu0 0
    %239 = vmatprep.subr.bf16.mxu0 0
    %240 = vmatpush1.bf16.msra.mxu0 0
    %241 = vmatprep.subr.bf16.mxu0 0
    %242 = vmatpush1.bf16.msra.mxu0 0
    %243 = vmatprep.subr.bf16.mxu0 0
    %244 = vmatpush1.bf16.msra.mxu0 0
    %245 = vmatprep.subr.bf16.mxu0 0
    %246 = vmatpush1.bf16.msra.mxu0 0
    %247 = vmatprep.subr.bf16.mxu0 0
    %248 = vmatpush1.bf16.msra.mxu0 0
    %249 = vmatprep.subr.bf16.mxu0 0
    %250 = vmatpush1.bf16.msra.mxu0 0
    %251 = vmatprep.mubr.bf16.mxu0 0
    %252 = vmatmul.mubr.bf16.gmra.mrb[0].mxu0 %v217
    %v253 = vpop.f32.mrb[0].mxu0
    %v254 = vadd.f32 %v189, %v253
    %v255 = vpop.f32.mrb[0].mxu0
    %v256 = vpop.f32.mrb[0].mxu0
    %v257 = vadd.f32 %v189, %v256
    %v258 = vpop.f32.mrb[0].mxu0
    %259 = vdwg.mxu0
    %260 = vst.msk [vmem:[#allocation11] sm:$0xff] %vm112, %v254
    %261 = vst.msk [vmem:[#allocation11 + $0x8] sm:$0xff] %vm112, %v257
    // Predicated region
    $region42: #{tpu_custom_call.1} parent=1 // pred_check
      _
    $region43: #{tpu_custom_call.1} parent=1 // pred_check_branch
      %263 = sbr.rel (0) target = $region45
    $region44: #{tpu_custom_call.1} parent=1 // pred_region
      %s265 = ssub.s32 256, 256
      %266 = vsyncadd [#allocation4], %s265
      %s267 = sshll.u32 [#allocation11], 4
      %s268 = int_to_ptr.vmem [resolvable:$true] %s267
      %273 = dma.vmem_to_hbm [thread:$0]  %s268, 256, %s5, [#allocation4], 128, 128, 8
    $region45: #{tpu_custom_call.1} parent=1 // pred_fallthru
      _
    // Predicated region
    $region46: #{tpu_custom_call.1} parent=1 // pred_check
      _
    $region47: #{tpu_custom_call.1} parent=1 // pred_check_branch
      %275 = sbr.rel (0) target = $region49
    $region48: #{tpu_custom_call.1} parent=1 // pred_region
      %276 = dma.done [#allocation4], 256
    $region49: #{tpu_custom_call.1} parent=1 // pred_fallthru
      _
    %277 = vsyncpa [#allocation3], 1
    %278 = vsyncpa [#allocation6], 1
    %279 = vsyncpa [#allocation9], 1
    %280 = vsyncpa [#allocation4], 1

</llo_original>
